<compile_context>
chip_gen: v5e
topology: v5e:2x2
jax: 0.10.0
libtpu: 0.0.40
codegen_flags: <defaults>
</compile_context>

<pallas_src>
import math

import jax
import jax.numpy as jnp
from jax.experimental import pallas as pl
from jax.experimental.pallas import tpu as pltpu


def _toy_model_kernel(m_ref, b_ref, x_ref, o_ref):
    """One batch tile in the native (batch, instances*features) layout.

    Shapes:
      m_ref: (IF, IF)  block-diagonal W^T W (per-instance), f32 or bf16
      b_ref: (1, IF)   bias, f32
      x_ref: (TB, IF)  activations, caller dtype
      o_ref: (TB, IF)  output, caller dtype
    """
    x = x_ref[...]
    m = m_ref[...]
    # Single fused contraction over (instance, feature); f32 accumulation on MXU.
    acc = jnp.dot(x, m, preferred_element_type=jnp.float32)       # (TB, IF) f32
    o_ref[...] = (acc + b_ref[...]).astype(o_ref.dtype)


def toy_model_forward(W, b_final, features, *, block_b: int = 8192):
    """Forward pass of the toy Model: per-instance W^T (W x) + b_final.

    W:        (I, H, F)
    b_final:  (I, F)
    features: (..., I, F)
    returns:  (..., I, F) in features.dtype
    """
    *lead, I, F = features.shape
    assert W.shape[0] == I and W.shape[2] == F, "W / features shape mismatch"
    IF = I * F

    # Fold the two contractions: out[..,i,f] = sum_g x[..,i,g] * M[i,g,f] + b[i,f]
    # with M[i,g,f] = sum_h W[i,h,g] W[i,h,f].  Tiny precompute (I*F*F floats).
    W32 = W.astype(jnp.float32)
    M = jnp.einsum('ihg,ihf->igf', W32, W32)                       # (I, F, F)
    eye = jnp.eye(I, dtype=jnp.float32)
    Mbd = (M[:, :, None, :] * eye[:, None, :, None]).reshape(IF, IF)  # block-diag
    if features.dtype == jnp.bfloat16:
        Mbd = Mbd.astype(jnp.bfloat16)      # bf16-native MXU operands, f32 acc
    bias = b_final.astype(jnp.float32).reshape(1, IF)

    # Native layout: (..., I, F) -> (B, I*F) is a free, contiguous reshape.
    x2 = features.reshape(-1, IF)
    B = x2.shape[0]

    # Batch tile: large, lane-dense-enough blocks; no padding, no HBM copies.
    block_b = max(8, (block_b // 8) * 8)
    if B <= block_b:
        tb = B                      # full-extent block (always legal)
    else:
        tb = block_b                # multiple of 8; ragged edge handled by Pallas
    grid = (pl.cdiv(B, tb),)

    # Scoped-VMEM budget: 2 double-buffered (tb x 128-lane) f32-sized tiles + slack.
    vmem_bytes = min(48 * 1024 * 1024,
                     max(16 * 1024 * 1024, 4 * tb * 128 * 4 + 4 * 1024 * 1024))

    out2 = pl.pallas_call(
        _toy_model_kernel,
        out_shape=jax.ShapeDtypeStruct((B, IF), features.dtype),
        grid=grid,
        in_specs=[
            pl.BlockSpec((IF, IF), lambda j: (0, 0)),   # M: fully resident
            pl.BlockSpec((1, IF), lambda j: (0, 0)),    # bias: fully resident
            pl.BlockSpec((tb, IF), lambda j: (j, 0)),   # batch-tiled activations
        ],
        out_specs=pl.BlockSpec((tb, IF), lambda j: (j, 0)),
        compiler_params=pltpu.CompilerParams(
            dimension_semantics=("parallel",),          # megacore over batch tiles
            vmem_limit_bytes=vmem_bytes,
        ),
    )(Mbd, bias, x2)

    return out2.reshape(*lead, I, F)


def reference_forward(W, b_final, features):
    hidden = jnp.einsum('ihf,...if->...ih', W, features)
    out = jnp.einsum('ihf,...ih->...if', W, hidden)
    return out + b_final


if __name__ == "__main__":
    # cfg = Config(n_instances=8, n_features=5, n_hidden=2)
    n_instances, n_features, n_hidden = 8, 5, 2
    batch = 4

    key = jax.random.PRNGKey(0)
    k_w, k_x, k_b, k_big = jax.random.split(key, 4)

    # Deterministic xavier_normal_-style init for W of shape (I, H, F).
    fan_in = n_hidden * n_features
    fan_out = n_instances * n_features
    xavier_std = math.sqrt(2.0 / (fan_in + fan_out))
    W = xavier_std * jax.random.normal(
        k_w, (n_instances, n_hidden, n_features), dtype=jnp.float32
    )
    b_final = jnp.zeros((n_instances, n_features), dtype=jnp.float32)
    features = jax.random.uniform(
        k_x, (batch, n_instances, n_features), dtype=jnp.float32
    )

    # Small run: single grid step, full-extent batch block.
    out = jax.block_until_ready(toy_model_forward(W, b_final, features))
    ref = reference_forward(W, b_final, features)
    assert out.shape == (batch, n_instances, n_features)
    assert jnp.allclose(out, ref, atol=1e-5, rtol=1e-5), "mismatch vs reference"

    # Larger run: multi-step grid, ragged final block (1000 = 7*128 + 104),
    # nonzero bias epilogue.
    big_batch = 1000
    b_nz = 0.1 * jax.random.normal(k_b, (n_instances, n_features), dtype=jnp.float32)
    feats_big = jax.random.uniform(
        k_big, (big_batch, n_instances, n_features), dtype=jnp.float32
    )
    out_big = jax.block_until_ready(
        toy_model_forward(W, b_nz, feats_big, block_b=128)
    )
    ref_big = reference_forward(W, b_nz, feats_big)
    assert jnp.allclose(out_big, ref_big, atol=1e-5, rtol=1e-5), "mismatch (big batch)"

    print("KERNEL_OK")
</pallas_src>

<mosaic_0001>
module attributes {stable_mosaic.version = 11 : i64} {
  func.func @_toy_model_kernel(%arg0: i32, %arg1: memref<40x40xf32, #tpu.memory_space<vmem>>, %arg2: memref<1x40xf32, #tpu.memory_space<vmem>>, %arg3: memref<4x40xf32, #tpu.memory_space<vmem>>, %arg4: memref<4x40xf32, #tpu.memory_space<vmem>>) attributes {dimension_semantics = [#tpu.dimension_semantics<parallel>], iteration_bounds = array<i64: 1>, scalar_prefetch = 0 : i64, scratch_operands = 0 : i64, tpu.core_type = #tpu.core_type<tc>, window_params = [{pipeline_mode = #tpu.pipeline_mode<synchronous>, transform_indices = @transform_0, window_bounds = array<i64: 40, 40>}, {pipeline_mode = #tpu.pipeline_mode<synchronous>, transform_indices = @transform_1, window_bounds = array<i64: 1, 40>}, {transform_indices = @transform_2, window_bounds = array<i64: 4, 40>}, {transform_indices = @transform_3, window_bounds = array<i64: 4, 40>}]} {
    %c0 = arith.constant 0 : index
    %c0_0 = arith.constant 0 : index
    %0 = vector.load %arg3[%c0, %c0_0] : memref<4x40xf32, #tpu.memory_space<vmem>>, vector<4x40xf32>
    %c0_1 = arith.constant 0 : index
    %c0_2 = arith.constant 0 : index
    %1 = vector.load %arg1[%c0_1, %c0_2] : memref<40x40xf32, #tpu.memory_space<vmem>>, vector<40x40xf32>
    %cst = arith.constant dense<0.000000e+00> : vector<4x40xf32>
    %2 = tpu.matmul %0, %1, %cst {dimension_numbers = #tpu.dot_dimension_numbers<[1], [0], [0], [1], [0, 0, 1, 1], [], []>} : vector<4x40xf32>, vector<40x40xf32>, vector<4x40xf32> -> vector<4x40xf32>
    %c0_3 = arith.constant 0 : index
    %c0_4 = arith.constant 0 : index
    %3 = vector.load %arg2[%c0_3, %c0_4] : memref<1x40xf32, #tpu.memory_space<vmem>>, vector<1x40xf32>
    %4 = vector.broadcast %3 : vector<1x40xf32> to vector<4x40xf32>
    %5 = arith.addf %2, %4 : vector<4x40xf32>
    %c0_5 = arith.constant 0 : index
    %c0_6 = arith.constant 0 : index
    %6 = vector.load %arg4[%c0_5, %c0_6] : memref<4x40xf32, #tpu.memory_space<vmem>>, vector<4x40xf32>
    tpu.vector_store %arg4[%c0_5, %c0_6], %5 {strides = array<i32>} : memref<4x40xf32, #tpu.memory_space<vmem>>, vector<4x40xf32>,
    return
  }
  func.func @transform_0(%arg0: i32) -> (i32, i32) {
    %c0_i32 = arith.constant 0 : i32
    %c0_i32_0 = arith.constant 0 : i32
    %c0_i32_1 = arith.constant 0 : i32
    return %c0_i32, %c0_i32_0 : i32, i32
  }
  func.func @transform_1(%arg0: i32) -> (i32, i32) {
    %c0_i32 = arith.constant 0 : i32
    %c0_i32_0 = arith.constant 0 : i32
    %c0_i32_1 = arith.constant 0 : i32
    return %c0_i32, %c0_i32_0 : i32, i32
  }
  func.func @transform_2(%arg0: i32) -> (i32, i32) {
    %c0_i32 = arith.constant 0 : i32
    %c0_i32_0 = arith.constant 0 : i32
    return %arg0, %c0_i32 : i32, i32
  }
  func.func @transform_3(%arg0: i32) -> (i32, i32) {
    %c0_i32 = arith.constant 0 : i32
    %c0_i32_0 = arith.constant 0 : i32
    return %arg0, %c0_i32 : i32, i32
  }
}

</mosaic_0001>

<llo_original>
// kernel: tpu_custom_call.1
$region0: #{tpu_custom_call.1}
  #allocation0 [shape = 'u32[]', space=smem, size = 0x4, offset = 0x4, fixed_abs, tag = 'smem constant byte address 0x4 - core index']
  #allocation1 [shape = 'u32[72,128]{1,0:T(1,128)}', space=vmem, size = 0x9000, scoped, tag = 'internal scratch']
  %s0 = inlined_call_operand.hbm [shape: f32[40,40], index: 0, kind: input, shape index: {}]
  %s1 = inlined_call_operand.hbm [shape: f32[1,40], index: 1, kind: input, shape index: {}]
  %s2 = inlined_call_operand.hbm [shape: f32[4,40], index: 2, kind: input, shape index: {}]
  %s3 = inlined_call_operand.hbm [shape: f32[4,40], index: 3, kind: output, shape index: {}]
  %s4 = sld [smem:[#allocation0]]
  $region34: #{tpu_custom_call.1} parent=0
    _
  %s6 = ssub.s32 1, %s4
  %s7 = scalar_select 0, %s6, %s4
  $region1: #{tpu_custom_call.1} parent=0
    #allocation2 [shape = 'u8[20480]{0}', space=vmem, size = 0x5000, scoped, tag = 'input window, operand 0, single buffered']
    #allocation3 [shape = 's32[1]{0}', space=sflag, size = 0x4, scoped, tag = 'scoped memory for tpu_custom_call.1']
    #allocation4 [shape = 's32[1]{0}', space=sflag, size = 0x4, scoped, tag = 'scoped memory for tpu_custom_call.1']
    #allocation5 [shape = 'u8[512]{0}', space=vmem, size = 0x400, scoped, tag = 'input window, operand 1, single buffered']
    #allocation6 [shape = 's32[1]{0}', space=sflag, size = 0x4, scoped, tag = 'scoped memory for tpu_custom_call.1']
    #allocation7 [shape = 'u8[2048]{0}', space=vmem, size = 0x800, scoped, tag = 'input window, operand 2, single buffered']
    #allocation8 [shape = 'u8[2048]{0}', space=vmem, size = 0x800, scoped, tag = 'output window, operand 0, single buffered']
    %8 = vsyncpa [#allocation3], 0
    %9 = vsyncpa [#allocation6], 0
    %10 = vsyncpa [#allocation4], 0
    // Predicated region
    $region2: #{tpu_custom_call.1} parent=1 // pred_check
      _
    $region3: #{tpu_custom_call.1} parent=1 // pred_check_branch
      %12 = sbr.rel (0) target = $region5
    $region4: #{tpu_custom_call.1} parent=1 // pred_region
      %14 = vsyncadd [#allocation3], 0
      %s15 = sshll.u32 %s0, 4
      %s16 = int_to_ptr.hbm [resolvable:$true] %s15
      %s17 = sshll.u32 [#allocation2], 4
      %s18 = int_to_ptr.vmem [resolvable:$true] %s17
      %23 = dma.hbm_to_vmem [thread:$0]  %s16, 640, %s18, [#allocation3], 128, 128, 8
    $region5: #{tpu_custom_call.1} parent=1 // pred_fallthru
      _
    // Predicated region
    $region6: #{tpu_custom_call.1} parent=1 // pred_check
      _
    $region7: #{tpu_custom_call.1} parent=1 // pred_check_branch
      %25 = sbr.rel (0) target = $region9
    $region8: #{tpu_custom_call.1} parent=1 // pred_region
      %27 = vsyncadd [#allocation6], 0
      %s29 = sshll.u32 %s1, 4
      %s30 = int_to_ptr.hbm [resolvable:$true] %s29
      %s31 = sshll.u32 [#allocation5], 4
      %s32 = int_to_ptr.vmem [resolvable:$true] %s31
      %34 = dma.hbm_to_vmem [thread:$0]  %s30, 16, %s32, [#allocation6]
    $region9: #{tpu_custom_call.1} parent=1 // pred_fallthru
      _
    // Predicated region
    $region10: #{tpu_custom_call.1} parent=1 // pred_check
      _
    $region11: #{tpu_custom_call.1} parent=1 // pred_check_branch
      %36 = sbr.rel (0) target = $region13
    $region12: #{tpu_custom_call.1} parent=1 // pred_region
      %38 = vsyncadd [#allocation6], 0
      %s40 = sshll.u32 %s2, 4
      %s41 = int_to_ptr.hbm [resolvable:$true] %s40
      %s42 = sshll.u32 [#allocation7], 4
      %s43 = int_to_ptr.vmem [resolvable:$true] %s42
      %45 = dma.hbm_to_vmem [thread:$0]  %s41, 64, %s43, [#allocation6]
    $region13: #{tpu_custom_call.1} parent=1 // pred_fallthru
      _
    // Predicated region
    $region14: #{tpu_custom_call.1} parent=1 // pred_check
      _
    $region15: #{tpu_custom_call.1} parent=1 // pred_check_branch
      %47 = sbr.rel (0) target = $region17
    $region16: #{tpu_custom_call.1} parent=1 // pred_region
      %49 = dma.done [#allocation3], 640
    $region17: #{tpu_custom_call.1} parent=1 // pred_fallthru
      _
    // Predicated region
    $region18: #{tpu_custom_call.1} parent=1 // pred_check
      _
    $region19: #{tpu_custom_call.1} parent=1 // pred_check_branch
      %51 = sbr.rel (0) target = $region21
    $region20: #{tpu_custom_call.1} parent=1 // pred_region
      %53 = dma.done [#allocation6], 16
    $region21: #{tpu_custom_call.1} parent=1 // pred_fallthru
      _
    // Predicated region
    $region22: #{tpu_custom_call.1} parent=1 // pred_check
      _
    $region23: #{tpu_custom_call.1} parent=1 // pred_check_branch
      %55 = sbr.rel (0) target = $region25
    $region24: #{tpu_custom_call.1} parent=1 // pred_region
      %57 = dma.done [#allocation6], 64
    $region25: #{tpu_custom_call.1} parent=1 // pred_fallthru
      _
    %v58 = vld [vmem:[#allocation7] sm:$0xf]
    %v59 = vld [vmem:[#allocation2] sm:$0xff]
    %v60 = vld [vmem:[#allocation2 + $0x8] sm:$0xff]
    %v61 = vld [vmem:[#allocation2 + $0x10] sm:$0xff]
    %v62 = vld [vmem:[#allocation2 + $0x18] sm:$0xff]
    %v63 = vld [vmem:[#allocation2 + $0x20] sm:$0xff]
    %v64 = vld [vmem:[#allocation5] sm:$0x1]
    %v66 = vperm.slane %v64, 0
    %vm68 = vcmask 326656
    %v70 = vsel %vm68, %v58, 0
    %72 = vmatpush.msra.mxu0 0.0
    %73 = vmatpush.msra.mxu0 0.0
    %74 = vmatpush.msra.mxu0 0.0
    %75 = vmatpush.msra.mxu0 0.0
    %76 = vmatpush.msra.mxu0 0.0
    %77 = vmatpush.msra.mxu0 0.0
    %78 = vmatpush.msra.mxu0 0.0
    %79 = vmatpush.msra.mxu0 0.0
    %80 = vmatpush.msra.mxu0 0.0
    %81 = vmatpush.msra.mxu0 0.0
    %82 = vmatpush.msra.mxu0 0.0
    %83 = vmatpush.msra.mxu0 %v63
    %84 = vmatpush.msra.mxu0 %v62
    %85 = vmatpush.msra.mxu0 %v61
    %86 = vmatpush.msra.mxu0 %v60
    %87 = vmatpush.msra.mxu0 %v59
    %88 = vmatmul.f32.gmra.mxu0 %v70
    %v89 = vpop.f32.mrf.mxu0
    %v90 = vadd.f32 %v66, %v89
    %91 = vdwg.mxu0
    %vm92 = vcmask 322560
    %93 = vst.msk [vmem:[#allocation8] sm:$0xf] %vm92, %v90
    // Predicated region
    $region26: #{tpu_custom_call.1} parent=1 // pred_check
      _
    $region27: #{tpu_custom_call.1} parent=1 // pred_check_branch
      %95 = sbr.rel (0) target = $region29
    $region28: #{tpu_custom_call.1} parent=1 // pred_region
      %97 = vsyncadd [#allocation4], 0
      %s99 = sshll.u32 [#allocation8], 4
      %s100 = int_to_ptr.vmem [resolvable:$true] %s99
      %s101 = sshll.u32 %s3, 4
      %s102 = int_to_ptr.hbm [resolvable:$true] %s101
      %104 = dma.vmem_to_hbm [thread:$0]  %s100, 64, %s102, [#allocation4]
    $region29: #{tpu_custom_call.1} parent=1 // pred_fallthru
      _
    // Predicated region
    $region30: #{tpu_custom_call.1} parent=1 // pred_check
      _
    $region31: #{tpu_custom_call.1} parent=1 // pred_check_branch
      %106 = sbr.rel (0) target = $region33
    $region32: #{tpu_custom_call.1} parent=1 // pred_region
      %108 = dma.done [#allocation4], 64
    $region33: #{tpu_custom_call.1} parent=1 // pred_fallthru
      _
    %109 = vsyncpa [#allocation3], 1
    %110 = vsyncpa [#allocation6], 1
    %111 = vsyncpa [#allocation4], 1

</llo_original>
